<compile_context>
chip_gen: v7x
topology: tpu7x:2x2x1
jax: 0.10.0
libtpu: 0.0.40
codegen_flags: <defaults>
</compile_context>

<pallas_src>
import functools
import numpy as np

import jax
import jax.numpy as jnp
from jax.experimental import pallas as pl
from jax.experimental.pallas import tpu as pltpu


# ----------------------------------------------------------------------------
# helpers
# ----------------------------------------------------------------------------
_BN_EPS = 1e-5
_BN_SCALE = float(1.0 / np.sqrt(1.0 + _BN_EPS))     # eval-mode BN (gamma=1,var=1)
CHANNEL_PLAN = (64, 128, 256, 512)


def _round_up(x, m):
    return ((x + m - 1) // m) * m


def _pick_tm(m):
    if m >= 512:
        return 256
    if m >= 128:
        return 128
    return _round_up(max(m, 1), 8)


def _pick_tile(dim_padded, candidates):
    for t in candidates:
        if dim_padded % t == 0:
            return t
    return 128


# ----------------------------------------------------------------------------
# Pallas kernel 1: tiled matmul, f32 accumulation into the resident out block,
#                  fused bias (folded BN) + optional residual + ReLU epilogue.
# ----------------------------------------------------------------------------
def _mm_kernel(*refs, relu, has_res):
    if has_res:
        x_ref, w_ref, b_ref, r_ref, o_ref = refs
    else:
        x_ref, w_ref, b_ref, o_ref = refs
        r_ref = None

    k = pl.program_id(2)
    nk = pl.num_programs(2)

    part = jnp.dot(x_ref[...], w_ref[...], preferred_element_type=jnp.float32)

    @pl.when(k == 0)
    def _():
        o_ref[...] = part

    @pl.when(k > 0)
    def _():
        o_ref[...] += part

    @pl.when(k == nk - 1)
    def _():
        y = o_ref[...] + b_ref[...]
        if r_ref is not None:
            y = y + r_ref[...]
        if relu:
            y = jnp.maximum(y, 0.0)
        o_ref[...] = y


def matmul_bias(x, w_pad, b_pad, residual=None, *, n_out, relu):
    """y = [relu](x @ w + bias [+ residual]).

    x:        [M, K]     any float dtype (cast to bf16 for the MXU)
    w_pad:    [Kp, Np]   bf16, padded to multiples of 128 at init (BN folded)
    b_pad:    [Np]       f32
    residual: [M, n_out] f32 or None
    returns   [M, n_out] f32
    """
    M, K = x.shape
    Kp, Np = w_pad.shape
    tm = _pick_tm(M)
    Mp = _round_up(M, tm)
    tn = _pick_tile(Np, (256, 128))
    tk = _pick_tile(Kp, (512, 384, 256, 128))

    xp = jnp.pad(x.astype(jnp.bfloat16), ((0, Mp - M), (0, Kp - K)))
    bp = b_pad.reshape(1, Np).astype(jnp.float32)

    in_specs = [
        pl.BlockSpec((tm, tk), lambda m, n, k: (m, k)),
        pl.BlockSpec((tk, tn), lambda m, n, k: (k, n)),
        pl.BlockSpec((1, tn), lambda m, n, k: (0, n)),
    ]
    operands = [xp, w_pad, bp]
    if residual is not None:
        rp = jnp.pad(residual.astype(jnp.float32),
                     ((0, Mp - M), (0, Np - residual.shape[1])))
        in_specs.append(pl.BlockSpec((tm, tn), lambda m, n, k: (m, n)))
        operands.append(rp)

    out = pl.pallas_call(
        functools.partial(_mm_kernel, relu=relu, has_res=residual is not None),
        out_shape=jax.ShapeDtypeStruct((Mp, Np), jnp.float32),
        grid_spec=pltpu.PrefetchScalarGridSpec(
            num_scalar_prefetch=0,
            grid=(Mp // tm, Np // tn, Kp // tk),
            in_specs=in_specs,
            out_specs=pl.BlockSpec((tm, tn), lambda m, n, k: (m, n)),
        ),
        compiler_params=pltpu.CompilerParams(
            dimension_semantics=("parallel", "parallel", "arbitrary")),
    )(*operands)
    return out[:M, :n_out]


# ----------------------------------------------------------------------------
# Pallas kernel 2: fused windowed-DFT power spectrum + mel filter bank
#   mel = (|frames @ cos_w|^2 + |frames @ sin_w|^2) @ mel_fb
# (hann window already folded into cos_w / sin_w at init)
# ----------------------------------------------------------------------------
def _melspec_kernel(f_ref, c_ref, s_ref, fb_ref, o_ref):
    f = f_ref[...]
    re = jnp.dot(f, c_ref[...], preferred_element_type=jnp.float32)
    im = jnp.dot(f, s_ref[...], preferred_element_type=jnp.float32)
    power = re * re + im * im
    o_ref[...] = jnp.dot(power, fb_ref[...], preferred_element_type=jnp.float32)


def mel_spectrogram(frames, cos_w, sin_w, mel_fb, *, n_mels):
    """frames: [M, n_fft] -> mel power [M, n_mels] (f32 for log/dB accuracy)."""
    M, K = frames.shape
    Kp, Fp = cos_w.shape
    Melp = mel_fb.shape[1]
    tm = _pick_tm(M)
    Mp = _round_up(M, tm)
    fp = jnp.pad(frames.astype(jnp.float32), ((0, Mp - M), (0, Kp - K)))

    out = pl.pallas_call(
        _melspec_kernel,
        out_shape=jax.ShapeDtypeStruct((Mp, Melp), jnp.float32),
        grid_spec=pltpu.PrefetchScalarGridSpec(
            num_scalar_prefetch=0,
            grid=(Mp // tm,),
            in_specs=[
                pl.BlockSpec((tm, Kp), lambda m: (m, 0)),
                pl.BlockSpec((Kp, Fp), lambda m: (0, 0)),
                pl.BlockSpec((Kp, Fp), lambda m: (0, 0)),
                pl.BlockSpec((Fp, Melp), lambda m: (0, 0)),
            ],
            out_specs=pl.BlockSpec((tm, Melp), lambda m: (m, 0)),
        ),
        compiler_params=pltpu.CompilerParams(
            dimension_semantics=("parallel",)),
    )(fp, cos_w, sin_w, mel_fb)
    return out[:M, :n_mels]


# ----------------------------------------------------------------------------
# Pallas kernel 3: fused 4-layer FC head
#   (Linear -> BN -> ReLU -> Dropout) x3 -> Linear     (eval: BN folded, drop=id)
# ----------------------------------------------------------------------------
def _head_kernel(x_ref, w1, b1, w2, b2, w3, b3, w4, b4, o_ref):
    h = jnp.dot(x_ref[...], w1[...], preferred_element_type=jnp.float32) + b1[...]
    h = jnp.maximum(h, 0.0).astype(jnp.bfloat16)
    h = jnp.dot(h, w2[...], preferred_element_type=jnp.float32) + b2[...]
    h = jnp.maximum(h, 0.0).astype(jnp.bfloat16)
    h = jnp.dot(h, w3[...], preferred_element_type=jnp.float32) + b3[...]
    h = jnp.maximum(h, 0.0).astype(jnp.bfloat16)
    o_ref[...] = jnp.dot(h, w4[...], preferred_element_type=jnp.float32) + b4[...]


@jax.jit
def head_forward(p, x):
    B, K = x.shape
    Kp = p["l1"]["w"].shape[0]
    Np = p["l4"]["w"].shape[1]
    Bp = _round_up(B, 8)
    xp = jnp.pad(x.astype(jnp.bfloat16), ((0, Bp - B), (0, Kp - K)))
    out = pl.pallas_call(
        _head_kernel,
        out_shape=jax.ShapeDtypeStruct((Bp, Np), jnp.float32),
    )(xp,
      p["l1"]["w"], p["l1"]["b"].reshape(1, -1),
      p["l2"]["w"], p["l2"]["b"].reshape(1, -1),
      p["l3"]["w"], p["l3"]["b"].reshape(1, -1),
      p["l4"]["w"], p["l4"]["b"].reshape(1, -1))
    return out[:B, :2]


# ----------------------------------------------------------------------------
# conv (NHWC, im2col channels-last) + folded-BN bias + optional residual + ReLU
# ----------------------------------------------------------------------------
def _im2col(x, kh, kw, stride, padding):
    B, H, W, C = x.shape
    OH = (H + 2 * padding - kh) // stride + 1
    OW = (W + 2 * padding - kw) // stride + 1
    xp = jnp.pad(x, ((0, 0), (padding, padding), (padding, padding), (0, 0)))
    cols = []
    for i in range(kh):
        for j in range(kw):
            cols.append(xp[:, i:i + stride * (OH - 1) + 1:stride,
                              j:j + stride * (OW - 1) + 1:stride, :])
    p = jnp.stack(cols, axis=3)                 # [B, OH, OW, kh*kw, C]
    return p.reshape(B * OH * OW, kh * kw * C), OH, OW


@functools.partial(jax.jit,
                   static_argnames=("kh", "kw", "stride", "padding", "cout", "relu"))
def conv_bn(x, w_pad, b_pad, residual=None, *, kh, kw, stride, padding, cout, relu):
    """x: [B,H,W,Cin] NHWC -> [B,OH,OW,cout] NHWC (f32)."""
    B = x.shape[0]
    patches, OH, OW = _im2col(x, kh, kw, stride, padding)
    res2d = None if residual is None else residual.reshape(B * OH * OW, cout)
    y = matmul_bias(patches, w_pad, b_pad, res2d, n_out=cout, relu=relu)
    return y.reshape(B, OH, OW, cout)


@functools.partial(jax.jit, static_argnames=("k", "stride", "padding"))
def maxpool2d(x, *, k=3, stride=2, padding=1):
    """Lane-dense NHWC max pool: elementwise max over k*k shifted slices."""
    B, H, W, C = x.shape
    OH = (H + 2 * padding - k) // stride + 1
    OW = (W + 2 * padding - k) // stride + 1
    xp = jnp.pad(x, ((0, 0), (padding, padding), (padding, padding), (0, 0)),
                 constant_values=-jnp.inf)
    out = None
    for i in range(k):
        for j in range(k):
            s = xp[:, i:i + stride * (OH - 1) + 1:stride,
                      j:j + stride * (OW - 1) + 1:stride, :]
            out = s if out is None else jnp.maximum(out, s)
    return out


@functools.partial(jax.jit, static_argnames=("n_out", "relu"))
def linear(x, w_pad, b_pad, *, n_out, relu):
    return matmul_bias(x, w_pad, b_pad, None, n_out=n_out, relu=relu)


# ----------------------------------------------------------------------------
# Mel-spectrogram front end (torchaudio MelSpectrogram: hann window, center
# constant pad per the module spec, power=2, slaney scale+norm) + amplitude_to_DB
# ----------------------------------------------------------------------------
def _slaney_mel_fb(n_freqs, f_min, f_max, n_mels, sample_rate):
    all_freqs = np.linspace(0.0, sample_rate / 2.0, n_freqs)

    def hz_to_mel(f):
        f = np.asarray(f, dtype=np.float64)
        lin = 3.0 * f / 200.0
        logstep = np.log(6.4) / 27.0
        return np.where(f >= 1000.0,
                        15.0 + np.log(np.maximum(f, 1e-10) / 1000.0) / logstep,
                        lin)

    def mel_to_hz(m):
        m = np.asarray(m, dtype=np.float64)
        lin = 200.0 * m / 3.0
        logstep = np.log(6.4) / 27.0
        return np.where(m >= 15.0, 1000.0 * np.exp(logstep * (m - 15.0)), lin)

    m_pts = np.linspace(hz_to_mel(f_min), hz_to_mel(f_max), n_mels + 2)
    f_pts = mel_to_hz(m_pts)
    f_diff = f_pts[1:] - f_pts[:-1]
    slopes = f_pts[None, :] - all_freqs[:, None]
    down = -slopes[:, :-2] / f_diff[:-1]
    up = slopes[:, 2:] / f_diff[1:]
    fb = np.maximum(0.0, np.minimum(down, up))
    enorm = 2.0 / (f_pts[2:n_mels + 2] - f_pts[:n_mels])
    return (fb * enorm[None, :]).astype(np.float32)       # [n_freqs, n_mels]


def make_mel_consts(n_fft, win_len, hop_len, n_mels, sample_rate=16000,
                    f_min=0.0, f_max=8000.0):
    """Precompute padded, window-folded DFT matrices and the mel filter bank."""
    n_freq = n_fft // 2 + 1
    n = np.arange(win_len)
    window = (0.5 - 0.5 * np.cos(2.0 * np.pi * n / win_len)).astype(np.float64)
    full_win = np.zeros(n_fft, dtype=np.float64)
    off = (n_fft - win_len) // 2
    full_win[off:off + win_len] = window                   # torchaudio-style center pad

    nn, kk = np.meshgrid(np.arange(n_fft), np.arange(n_freq), indexing="ij")
    ang = 2.0 * np.pi * nn * kk / n_fft
    cos_w = (np.cos(ang) * full_win[:, None]).astype(np.float32)
    sin_w = (np.sin(ang) * full_win[:, None]).astype(np.float32)
    fb = _slaney_mel_fb(n_freq, f_min, f_max, n_mels, sample_rate)

    Kp = _round_up(n_fft, 128)
    Fp = _round_up(n_freq, 128)
    Mp = _round_up(n_mels, 128)
    pad2 = lambda a, r, c: np.pad(a, ((0, r - a.shape[0]), (0, c - a.shape[1])))
    return {"cos_w": jnp.asarray(pad2(cos_w, Kp, Fp)),
            "sin_w": jnp.asarray(pad2(sin_w, Kp, Fp)),
            "mel_fb": jnp.asarray(pad2(fb, Fp, Mp))}


@functools.partial(jax.jit, static_argnames=("n_fft", "hop", "n_mels"))
def mel_frontend(x_list, cos_w, sin_w, mel_fb, *, n_fft, hop, n_mels):
    """x_list: [B, 2, T] -> NHWC 3-channel dB images [2, B, n_mels, nF, 3]."""
    B = x_list.shape[0]
    wav = jnp.transpose(x_list, (1, 0, 2)).reshape(2 * B, -1)   # channel-major [2B, T]
    pad = n_fft // 2
    wp = jnp.pad(wav, ((0, 0), (pad, pad)))                     # center, constant pad (spec)
    nF = 1 + (wp.shape[1] - n_fft) // hop
    frames = jnp.stack([wp[:, t * hop:t * hop + n_fft] for t in range(nF)], axis=1)

    mel = mel_spectrogram(frames.reshape(2 * B * nF, n_fft),
                          cos_w, sin_w, mel_fb, n_mels=n_mels)  # [2B*nF, n_mels]
    mel = mel.reshape(2, B, nF, n_mels).transpose(0, 1, 3, 2)   # [2, B, n_mels, nF]

    # torchaudio amplitude_to_DB with db_multiplier = log10(max(x)) and the
    # top_db clamp — both global per channel-tensor (per the module's forward).
    amax = jnp.max(mel, axis=(1, 2, 3), keepdims=True)
    db = (10.0 * jnp.log10(jnp.maximum(mel, 1e-10))
          - 10.0 * jnp.log10(jnp.maximum(amax, 1e-10)))
    db = jnp.maximum(db, jnp.max(db, axis=(1, 2, 3), keepdims=True) - 80.0)
    return jnp.stack([db, db, db], axis=-1)                     # [2, B, n_mels, nF, 3]


# ----------------------------------------------------------------------------
# parameter construction (weights pre-transposed / BN-folded / padded / bf16)
# ----------------------------------------------------------------------------
def _make_conv(key, cin, cout, k):
    fan_in = cin * k * k
    w = jax.random.normal(key, (k, k, cin, cout), jnp.float32) * np.sqrt(2.0 / fan_in)
    w = (w * _BN_SCALE).reshape(k * k * cin, cout)     # fold eval-mode BN scale
    Kp, Np = _round_up(k * k * cin, 128), _round_up(cout, 128)
    wp = jnp.pad(w, ((0, Kp - w.shape[0]), (0, Np - cout))).astype(jnp.bfloat16)
    return {"w": wp, "b": jnp.zeros((Np,), jnp.float32)}   # folded BN bias (beta=0)


def _make_linear(key, i, o, bn_after=False):
    kw, kb = jax.random.split(key)
    w = jax.random.normal(kw, (i, o), jnp.float32) * np.sqrt(2.0 / i)
    b = jax.random.normal(kb, (o,), jnp.float32) * 0.01
    s = _BN_SCALE if bn_after else 1.0
    Kp, Np = _round_up(i, 128), _round_up(o, 128)
    wp = jnp.pad(w * s, ((0, Kp - i), (0, Np - o))).astype(jnp.bfloat16)
    bp = jnp.pad(b * s, (0, Np - o)).astype(jnp.float32)
    return {"w": wp, "b": bp}


def init_resnet18(key):
    # TODO(synk): pretrained torchvision weights unavailable here — He init used.
    ki = iter(jax.random.split(key, 32))
    p = {"conv1": _make_conv(next(ki), 3, 64, 7), "layers": []}
    in_c = 64
    for li, c in enumerate(CHANNEL_PLAN):
        blocks = []
        for bi in range(2):
            stride = 2 if (li > 0 and bi == 0) else 1
            blk = {"conv1": _make_conv(next(ki), in_c, c, 3),
                   "conv2": _make_conv(next(ki), c, c, 3)}
            if stride != 1 or in_c != c:
                blk["ds"] = _make_conv(next(ki), in_c, c, 1)
            blocks.append(blk)
            in_c = c
        p["layers"].append(blocks)
    p["fc"] = _make_linear(next(ki), 512, 1000, bn_after=False)
    return p


def init_head(key, in_dim, num_ftrs):
    k1, k2, k3, k4 = jax.random.split(key, 4)
    return {"l1": _make_linear(k1, in_dim, num_ftrs, bn_after=True),
            "l2": _make_linear(k2, num_ftrs, 128, bn_after=True),
            "l3": _make_linear(k3, 128, 64, bn_after=True),
            "l4": _make_linear(k4, 64, 2, bn_after=False)}


# ----------------------------------------------------------------------------
# ResNet-18 forward (NHWC, eval-mode BN folded)
# ----------------------------------------------------------------------------
def resnet18_forward(p, x):
    """x: [B, H, W, 3] NHWC -> [B, 1000]."""
    x = conv_bn(x, p["conv1"]["w"], p["conv1"]["b"],
                kh=7, kw=7, stride=2, padding=3, cout=64, relu=True)
    x = maxpool2d(x, k=3, stride=2, padding=1)
    for li, c in enumerate(CHANNEL_PLAN):
        for bi in range(2):
            blk = p["layers"][li][bi]
            stride = 2 if (li > 0 and bi == 0) else 1
            identity = x
            out = conv_bn(x, blk["conv1"]["w"], blk["conv1"]["b"],
                          kh=3, kw=3, stride=stride, padding=1, cout=c, relu=True)
            if "ds" in blk:
                identity = conv_bn(x, blk["ds"]["w"], blk["ds"]["b"],
                                   kh=1, kw=1, stride=stride, padding=0,
                                   cout=c, relu=False)
            x = conv_bn(out, blk["conv2"]["w"], blk["conv2"]["b"], identity,
                        kh=3, kw=3, stride=1, padding=1, cout=c, relu=True)
    feat = jnp.mean(x, axis=(1, 2))                       # adaptive avg pool -> [B, 512]
    return linear(feat, p["fc"]["w"], p["fc"]["b"], n_out=1000, relu=False)


# ----------------------------------------------------------------------------
# Full model forward (matches the PyTorch module's forward, eval mode)
# ----------------------------------------------------------------------------
def model_forward(params, x_list, *, n_fft, hop, n_mels):
    """x_list: [B, 2, T] (phrase, vowel waveforms) -> [B, 2] logits."""
    imgs = mel_frontend(x_list, params["mel"]["cos_w"], params["mel"]["sin_w"],
                        params["mel"]["mel_fb"],
                        n_fft=n_fft, hop=hop, n_mels=n_mels)   # [2,B,n_mels,nF,3]
    phrase = resnet18_forward(params["res_phrase"], imgs[0])   # [B, 1000]
    vowel = resnet18_forward(params["res_vowel"], imgs[1])     # [B, 1000]
    feat = jnp.concatenate([phrase, vowel], axis=1)            # [B, 2000]
    return head_forward(params["fc"], feat)                    # [B, 2]


# ----------------------------------------------------------------------------
if __name__ == "__main__":
    # small but structurally consistent shapes
    B, T = 2, 256
    MEL_BINS, N_FFT, WIN_LEN, HOP_LEN = 16, 64, 64, 32
    NUM_FTRS = 1000    # resnet18 fc.out_features

    master = jax.random.PRNGKey(0)
    k_data, k_p, k_v, k_fc = jax.random.split(master, 4)

    x_list = jax.random.normal(k_data, (B, 2, T), jnp.float32)

    params = {
        "res_phrase": init_resnet18(k_p),
        "res_vowel": init_resnet18(k_v),
        "fc": init_head(k_fc, 2 * NUM_FTRS, NUM_FTRS),
        "mel": make_mel_consts(N_FFT, WIN_LEN, HOP_LEN, MEL_BINS),
    }

    out = model_forward(params, x_list, n_fft=N_FFT, hop=HOP_LEN, n_mels=MEL_BINS)
    out = jax.block_until_ready(out)
    assert out.shape == (B, 2), out.shape
    assert bool(jnp.all(jnp.isfinite(out)))
    print("KERNEL_OK")
</pallas_src>

<mosaic_0001>
module attributes {stable_mosaic.version = 11 : i64} {
  func.func @_melspec_kernel(%arg0: i32, %arg1: memref<40x128xf32, #tpu.memory_space<vmem>>, %arg2: memref<128x128xf32, #tpu.memory_space<vmem>>, %arg3: memref<128x128xf32, #tpu.memory_space<vmem>>, %arg4: memref<128x128xf32, #tpu.memory_space<vmem>>, %arg5: memref<40x128xf32, #tpu.memory_space<vmem>>) attributes {dimension_semantics = [#tpu.dimension_semantics<parallel>], iteration_bounds = array<i64: 1>, scalar_prefetch = 0 : i64, scratch_operands = 0 : i64, tpu.core_type = #tpu.core_type<tc>, window_params = [{transform_indices = @transform_0, window_bounds = array<i64: 40, 128>}, {pipeline_mode = #tpu.pipeline_mode<synchronous>, transform_indices = @transform_1, window_bounds = array<i64: 128, 128>}, {pipeline_mode = #tpu.pipeline_mode<synchronous>, transform_indices = @transform_2, window_bounds = array<i64: 128, 128>}, {pipeline_mode = #tpu.pipeline_mode<synchronous>, transform_indices = @transform_3, window_bounds = array<i64: 128, 128>}, {transform_indices = @transform_4, window_bounds = array<i64: 40, 128>}]} {
    %c0 = arith.constant 0 : index
    %c0_0 = arith.constant 0 : index
    %0 = vector.load %arg1[%c0, %c0_0] : memref<40x128xf32, #tpu.memory_space<vmem>>, vector<40x128xf32>
    %c0_1 = arith.constant 0 : index
    %c0_2 = arith.constant 0 : index
    %1 = vector.load %arg2[%c0_1, %c0_2] : memref<128x128xf32, #tpu.memory_space<vmem>>, vector<128x128xf32>
    %cst = arith.constant dense<0.000000e+00> : vector<40x128xf32>
    %2 = tpu.matmul %0, %1, %cst {dimension_numbers = #tpu.dot_dimension_numbers<[1], [0], [0], [1], [0, 0, 1, 1], [], []>} : vector<40x128xf32>, vector<128x128xf32>, vector<40x128xf32> -> vector<40x128xf32>
    %c0_3 = arith.constant 0 : index
    %c0_4 = arith.constant 0 : index
    %3 = vector.load %arg3[%c0_3, %c0_4] : memref<128x128xf32, #tpu.memory_space<vmem>>, vector<128x128xf32>
    %cst_5 = arith.constant dense<0.000000e+00> : vector<40x128xf32>
    %4 = tpu.matmul %0, %3, %cst_5 {dimension_numbers = #tpu.dot_dimension_numbers<[1], [0], [0], [1], [0, 0, 1, 1], [], []>} : vector<40x128xf32>, vector<128x128xf32>, vector<40x128xf32> -> vector<40x128xf32>
    %5 = arith.mulf %2, %2 : vector<40x128xf32>
    %6 = arith.mulf %4, %4 : vector<40x128xf32>
    %7 = arith.addf %5, %6 : vector<40x128xf32>
    %c0_6 = arith.constant 0 : index
    %c0_7 = arith.constant 0 : index
    %8 = vector.load %arg4[%c0_6, %c0_7] : memref<128x128xf32, #tpu.memory_space<vmem>>, vector<128x128xf32>
    %cst_8 = arith.constant dense<0.000000e+00> : vector<40x128xf32>
    %9 = tpu.matmul %7, %8, %cst_8 {dimension_numbers = #tpu.dot_dimension_numbers<[1], [0], [0], [1], [0, 0, 1, 1], [], []>} : vector<40x128xf32>, vector<128x128xf32>, vector<40x128xf32> -> vector<40x128xf32>
    %c0_9 = arith.constant 0 : index
    %c0_10 = arith.constant 0 : index
    %10 = vector.load %arg5[%c0_9, %c0_10] : memref<40x128xf32, #tpu.memory_space<vmem>>, vector<40x128xf32>
    tpu.vector_store %arg5[%c0_9, %c0_10], %9 {strides = array<i32>} : memref<40x128xf32, #tpu.memory_space<vmem>>, vector<40x128xf32>,
    return
  }
  func.func @transform_0(%arg0: i32) -> (i32, i32) {
    %c0_i32 = arith.constant 0 : i32
    %c0_i32_0 = arith.constant 0 : i32
    return %arg0, %c0_i32 : i32, i32
  }
  func.func @transform_1(%arg0: i32) -> (i32, i32) {
    %c0_i32 = arith.constant 0 : i32
    %c0_i32_0 = arith.constant 0 : i32
    %c0_i32_1 = arith.constant 0 : i32
    return %c0_i32, %c0_i32_0 : i32, i32
  }
  func.func @transform_2(%arg0: i32) -> (i32, i32) {
    %c0_i32 = arith.constant 0 : i32
    %c0_i32_0 = arith.constant 0 : i32
    %c0_i32_1 = arith.constant 0 : i32
    return %c0_i32, %c0_i32_0 : i32, i32
  }
  func.func @transform_3(%arg0: i32) -> (i32, i32) {
    %c0_i32 = arith.constant 0 : i32
    %c0_i32_0 = arith.constant 0 : i32
    %c0_i32_1 = arith.constant 0 : i32
    return %c0_i32, %c0_i32_0 : i32, i32
  }
  func.func @transform_4(%arg0: i32) -> (i32, i32) {
    %c0_i32 = arith.constant 0 : i32
    %c0_i32_0 = arith.constant 0 : i32
    return %arg0, %c0_i32 : i32, i32
  }
}

</mosaic_0001>

<llo_original>
// kernel: mel_frontend.1
$region0: #{mel_frontend.1}
  #allocation0 [shape = 'u32[]', space=smem, size = 0x4, offset = 0x4, fixed_abs, tag = 'smem constant byte address 0x4 - core index']
  #allocation1 [shape = 'u32[144,128]{1,0:T(1,128)}', space=vmem, size = 0x12000, scoped, tag = 'internal scratch']
  %s0 = inlined_call_operand.vmem [shape: f32[40,128], index: 0, kind: input, shape index: {}]
  %s1 = inlined_call_operand.vmem [shape: f32[128,128], index: 1, kind: input, shape index: {}]
  %s2 = inlined_call_operand.vmem [shape: f32[128,128], index: 2, kind: input, shape index: {}]
  %s3 = inlined_call_operand.vmem [shape: f32[128,128], index: 3, kind: input, shape index: {}]
  %s4 = inlined_call_operand.vmem [shape: f32[40,128], index: 4, kind: output, shape index: {}]
  %s5 = sld [smem:[#allocation0]]
  $region26: #{mel_frontend.1} parent=0
    _
  %s7 = ssub.s32 1, %s5
  %s8 = scalar_select 0, %s7, %s5
  // Predicated region
  $region2: #{mel_frontend.1} parent=0 // pred_check
    _
  $region3: #{mel_frontend.1} parent=0 // pred_check_branch
    %10 = sbr.rel (0) target = $region5
  $region4: #{mel_frontend.1} parent=0 // pred_region
    _
  $region5: #{mel_frontend.1} parent=0 // pred_fallthru
    _
  // Predicated region
  $region6: #{mel_frontend.1} parent=0 // pred_check
    _
  $region7: #{mel_frontend.1} parent=0 // pred_check_branch
    %12 = sbr.rel (0) target = $region9
  $region8: #{mel_frontend.1} parent=0 // pred_region
    _
  $region9: #{mel_frontend.1} parent=0 // pred_fallthru
    _
  // Predicated region
  $region10: #{mel_frontend.1} parent=0 // pred_check
    _
  $region11: #{mel_frontend.1} parent=0 // pred_check_branch
    %14 = sbr.rel (0) target = $region13
  $region12: #{mel_frontend.1} parent=0 // pred_region
    _
  $region13: #{mel_frontend.1} parent=0 // pred_fallthru
    _
  // Predicated region
  $region14: #{mel_frontend.1} parent=0 // pred_check
    _
  $region15: #{mel_frontend.1} parent=0 // pred_check_branch
    %16 = sbr.rel (0) target = $region17
  $region16: #{mel_frontend.1} parent=0 // pred_region
    _
  $region17: #{mel_frontend.1} parent=0 // pred_fallthru
    _
  %v17 = vld [vmem:[%s0] sm:$0xff]
  %v18 = vld [vmem:[%s0 + $0x8] sm:$0xff]
  %v19 = vld [vmem:[%s0 + $0x10] sm:$0xff]
  %v20 = vld [vmem:[%s0 + $0x18] sm:$0xff]
  %v21 = vld [vmem:[%s0 + $0x20] sm:$0xff]
  %v22 = vld [vmem:[%s1] sm:$0xff]
  %v23 = vld [vmem:[%s1 + $0x8] sm:$0xff]
  %v24 = vld [vmem:[%s1 + $0x10] sm:$0xff]
  %v25 = vld [vmem:[%s1 + $0x18] sm:$0xff]
  %v26 = vld [vmem:[%s1 + $0x20] sm:$0xff]
  %v27 = vld [vmem:[%s1 + $0x28] sm:$0xff]
  %v28 = vld [vmem:[%s1 + $0x30] sm:$0xff]
  %v29 = vld [vmem:[%s1 + $0x38] sm:$0xff]
  %v30 = vld [vmem:[%s1 + $0x40] sm:$0xff]
  %v31 = vld [vmem:[%s1 + $0x48] sm:$0xff]
  %v32 = vld [vmem:[%s1 + $0x50] sm:$0xff]
  %v33 = vld [vmem:[%s1 + $0x58] sm:$0xff]
  %v34 = vld [vmem:[%s1 + $0x60] sm:$0xff]
  %v35 = vld [vmem:[%s1 + $0x68] sm:$0xff]
  %v36 = vld [vmem:[%s1 + $0x70] sm:$0xff]
  %v37 = vld [vmem:[%s1 + $0x78] sm:$0xff]
  %38 = vmatprep.subr.mxu0 0.0
  %39 = vmatpush1.msra.mxu0 %v22
  %40 = vmatprep.subr.mxu0 0.0
  %41 = vmatpush1.msra.mxu0 %v23
  %42 = vmatprep.subr.mxu0 0.0
  %43 = vmatpush1.msra.mxu0 %v24
  %44 = vmatprep.subr.mxu0 0.0
  %45 = vmatpush1.msra.mxu0 %v25
  %46 = vmatprep.subr.mxu0 0.0
  %47 = vmatpush1.msra.mxu0 %v26
  %48 = vmatprep.subr.mxu0 0.0
  %49 = vmatpush1.msra.mxu0 %v27
  %50 = vmatprep.subr.mxu0 0.0
  %51 = vmatpush1.msra.mxu0 %v28
  %52 = vmatprep.subr.mxu0 0.0
  %53 = vmatpush1.msra.mxu0 %v29
  %54 = vmatprep.subr.mxu0 0.0
  %55 = vmatpush1.msra.mxu0 %v30
  %56 = vmatprep.subr.mxu0 0.0
  %57 = vmatpush1.msra.mxu0 %v31
  %58 = vmatprep.subr.mxu0 0.0
  %59 = vmatpush1.msra.mxu0 %v32
  %60 = vmatprep.subr.mxu0 0.0
  %61 = vmatpush1.msra.mxu0 %v33
  %62 = vmatprep.subr.mxu0 0.0
  %63 = vmatpush1.msra.mxu0 %v34
  %64 = vmatprep.subr.mxu0 0.0
  %65 = vmatpush1.msra.mxu0 %v35
  %66 = vmatprep.subr.mxu0 0.0
  %67 = vmatpush1.msra.mxu0 %v36
  %68 = vmatprep.subr.mxu0 0.0
  %69 = vmatpush1.msra.mxu0 %v37
  %70 = vmatprep.subr.mxu0 0.0
  %71 = vmatpush1.msra.mxu0 0.0
  %72 = vmatprep.subr.mxu0 0.0
  %73 = vmatpush1.msra.mxu0 0.0
  %74 = vmatprep.subr.mxu0 0.0
  %75 = vmatpush1.msra.mxu0 0.0
  %76 = vmatprep.subr.mxu0 0.0
  %77 = vmatpush1.msra.mxu0 0.0
  %78 = vmatprep.subr.mxu0 0.0
  %79 = vmatpush1.msra.mxu0 0.0
  %80 = vmatprep.subr.mxu0 0.0
  %81 = vmatpush1.msra.mxu0 0.0
  %82 = vmatprep.subr.mxu0 0.0
  %83 = vmatpush1.msra.mxu0 0.0
  %84 = vmatprep.subr.mxu0 0.0
  %85 = vmatpush1.msra.mxu0 0.0
  %86 = vmatprep.subr.mxu0 0.0
  %87 = vmatpush1.msra.mxu0 0.0
  %88 = vmatprep.subr.mxu0 0.0
  %89 = vmatpush1.msra.mxu0 0.0
  %90 = vmatprep.subr.mxu0 0.0
  %91 = vmatpush1.msra.mxu0 0.0
  %92 = vmatprep.subr.mxu0 0.0
  %93 = vmatpush1.msra.mxu0 0.0
  %94 = vmatprep.subr.mxu0 0.0
  %95 = vmatpush1.msra.mxu0 0.0
  %96 = vmatprep.subr.mxu0 0.0
  %97 = vmatpush1.msra.mxu0 0.0
  %98 = vmatprep.subr.mxu0 0.0
  %99 = vmatpush1.msra.mxu0 0.0
  %100 = vmatprep.subr.mxu0 0.0
  %101 = vmatpush1.msra.mxu0 0.0
  %102 = vmatprep.mubr.f32.mxu0 0.0
  %103 = vmatmul.mubr.f32.gmra.mrb[0].mxu0 %v17
  %v104 = vpop.f32.mrb[0].mxu0
  %v105 = vadd.f32 0.0, %v104
  %v106 = vpop.f32.mrb[0].mxu0
  %107 = vmatprep.mubr.f32.mxu0 0.0
  %108 = vmatmul.mubr.f32.gmra.mrb[0].mxu0 %v18
  %v109 = vpop.f32.mrb[0].mxu0
  %v110 = vadd.f32 0.0, %v109
  %v111 = vpop.f32.mrb[0].mxu0
  %112 = vmatprep.mubr.f32.mxu0 0.0
  %113 = vmatmul.mubr.f32.gmra.mrb[0].mxu0 %v19
  %v114 = vpop.f32.mrb[0].mxu0
  %v115 = vadd.f32 0.0, %v114
  %v116 = vpop.f32.mrb[0].mxu0
  %117 = vmatprep.mubr.f32.mxu0 0.0
  %118 = vmatmul.mubr.f32.gmra.mrb[0].mxu0 %v20
  %v119 = vpop.f32.mrb[0].mxu0
  %v120 = vadd.f32 0.0, %v119
  %v121 = vpop.f32.mrb[0].mxu0
  %122 = vmatprep.mubr.f32.mxu0 0.0
  %123 = vmatmul.mubr.f32.gmra.mrb[0].mxu0 %v21
  %v124 = vpop.f32.mrb[0].mxu0
  %v125 = vadd.f32 0.0, %v124
  %v126 = vpop.f32.mrb[0].mxu0
  %127 = vdwg.mxu0
  %v128 = vld [vmem:[%s2] sm:$0xff]
  %v129 = vld [vmem:[%s2 + $0x8] sm:$0xff]
  %v130 = vld [vmem:[%s2 + $0x10] sm:$0xff]
  %v131 = vld [vmem:[%s2 + $0x18] sm:$0xff]
  %v132 = vld [vmem:[%s2 + $0x20] sm:$0xff]
  %v133 = vld [vmem:[%s2 + $0x28] sm:$0xff]
  %v134 = vld [vmem:[%s2 + $0x30] sm:$0xff]
  %v135 = vld [vmem:[%s2 + $0x38] sm:$0xff]
  %v136 = vld [vmem:[%s2 + $0x40] sm:$0xff]
  %v137 = vld [vmem:[%s2 + $0x48] sm:$0xff]
  %v138 = vld [vmem:[%s2 + $0x50] sm:$0xff]
  %v139 = vld [vmem:[%s2 + $0x58] sm:$0xff]
  %v140 = vld [vmem:[%s2 + $0x60] sm:$0xff]
  %v141 = vld [vmem:[%s2 + $0x68] sm:$0xff]
  %v142 = vld [vmem:[%s2 + $0x70] sm:$0xff]
  %v143 = vld [vmem:[%s2 + $0x78] sm:$0xff]
  %144 = vmatprep.subr.mxu0 0.0
  %145 = vmatpush1.msra.mxu0 %v128
  %146 = vmatprep.subr.mxu0 0.0
  %147 = vmatpush1.msra.mxu0 %v129
  %148 = vmatprep.subr.mxu0 0.0
  %149 = vmatpush1.msra.mxu0 %v130
  %150 = vmatprep.subr.mxu0 0.0
  %151 = vmatpush1.msra.mxu0 %v131
  %152 = vmatprep.subr.mxu0 0.0
  %153 = vmatpush1.msra.mxu0 %v132
  %154 = vmatprep.subr.mxu0 0.0
  %155 = vmatpush1.msra.mxu0 %v133
  %156 = vmatprep.subr.mxu0 0.0
  %157 = vmatpush1.msra.mxu0 %v134
  %158 = vmatprep.subr.mxu0 0.0
  %159 = vmatpush1.msra.mxu0 %v135
  %160 = vmatprep.subr.mxu0 0.0
  %161 = vmatpush1.msra.mxu0 %v136
  %162 = vmatprep.subr.mxu0 0.0
  %163 = vmatpush1.msra.mxu0 %v137
  %164 = vmatprep.subr.mxu0 0.0
  %165 = vmatpush1.msra.mxu0 %v138
  %166 = vmatprep.subr.mxu0 0.0
  %167 = vmatpush1.msra.mxu0 %v139
  %168 = vmatprep.subr.mxu0 0.0
  %169 = vmatpush1.msra.mxu0 %v140
  %170 = vmatprep.subr.mxu0 0.0
  %171 = vmatpush1.msra.mxu0 %v141
  %172 = vmatprep.subr.mxu0 0.0
  %173 = vmatpush1.msra.mxu0 %v142
  %174 = vmatprep.subr.mxu0 0.0
  %175 = vmatpush1.msra.mxu0 %v143
  %176 = vmatprep.subr.mxu0 0.0
  %177 = vmatpush1.msra.mxu0 0.0
  %178 = vmatprep.subr.mxu0 0.0
  %179 = vmatpush1.msra.mxu0 0.0
  %180 = vmatprep.subr.mxu0 0.0
  %181 = vmatpush1.msra.mxu0 0.0
  %182 = vmatprep.subr.mxu0 0.0
  %183 = vmatpush1.msra.mxu0 0.0
  %184 = vmatprep.subr.mxu0 0.0
  %185 = vmatpush1.msra.mxu0 0.0
  %186 = vmatprep.subr.mxu0 0.0
  %187 = vmatpush1.msra.mxu0 0.0
  %188 = vmatprep.subr.mxu0 0.0
  %189 = vmatpush1.msra.mxu0 0.0
  %190 = vmatprep.subr.mxu0 0.0
  %191 = vmatpush1.msra.mxu0 0.0
  %192 = vmatprep.subr.mxu0 0.0
  %193 = vmatpush1.msra.mxu0 0.0
  %194 = vmatprep.subr.mxu0 0.0
  %195 = vmatpush1.msra.mxu0 0.0
  %196 = vmatprep.subr.mxu0 0.0
  %197 = vmatpush1.msra.mxu0 0.0
  %198 = vmatprep.subr.mxu0 0.0
  %199 = vmatpush1.msra.mxu0 0.0
  %200 = vmatprep.subr.mxu0 0.0
  %201 = vmatpush1.msra.mxu0 0.0
  %202 = vmatprep.subr.mxu0 0.0
  %203 = vmatpush1.msra.mxu0 0.0
  %204 = vmatprep.subr.mxu0 0.0
  %205 = vmatpush1.msra.mxu0 0.0
  %206 = vmatprep.subr.mxu0 0.0
  %207 = vmatpush1.msra.mxu0 0.0
  %208 = vmatprep.mubr.f32.mxu0 0.0
  %209 = vmatmul.mubr.f32.gmra.mrb[0].mxu0 %v17
  %v210 = vpop.f32.mrb[0].mxu0
  %v211 = vadd.f32 0.0, %v210
  %v212 = vpop.f32.mrb[0].mxu0
  %213 = vmatprep.mubr.f32.mxu0 0.0
  %214 = vmatmul.mubr.f32.gmra.mrb[0].mxu0 %v18
  %v215 = vpop.f32.mrb[0].mxu0
  %v216 = vadd.f32 0.0, %v215
  %v217 = vpop.f32.mrb[0].mxu0
  %218 = vmatprep.mubr.f32.mxu0 0.0
  %219 = vmatmul.mubr.f32.gmra.mrb[0].mxu0 %v19
  %v220 = vpop.f32.mrb[0].mxu0
  %v221 = vadd.f32 0.0, %v220
  %v222 = vpop.f32.mrb[0].mxu0
  %223 = vmatprep.mubr.f32.mxu0 0.0
  %224 = vmatmul.mubr.f32.gmra.mrb[0].mxu0 %v20
  %v225 = vpop.f32.mrb[0].mxu0
  %v226 = vadd.f32 0.0, %v225
  %v227 = vpop.f32.mrb[0].mxu0
  %228 = vmatprep.mubr.f32.mxu0 0.0
  %229 = vmatmul.mubr.f32.gmra.mrb[0].mxu0 %v21
  %v230 = vpop.f32.mrb[0].mxu0
  %v231 = vadd.f32 0.0, %v230
  %v232 = vpop.f32.mrb[0].mxu0
  %233 = vdwg.mxu0
  %v234 = vmul.f32 %v105, %v105
  %v235 = vmul.f32 %v110, %v110
  %v236 = vmul.f32 %v115, %v115
  %v237 = vmul.f32 %v120, %v120
  %v238 = vmul.f32 %v125, %v125
  %v239 = vmul.f32 %v211, %v211
  %v240 = vmul.f32 %v216, %v216
  %v241 = vmul.f32 %v221, %v221
  %v242 = vmul.f32 %v226, %v226
  %v243 = vmul.f32 %v231, %v231
  %v244 = vadd.f32 %v234, %v239
  %v245 = vadd.f32 %v235, %v240
  %v246 = vadd.f32 %v236, %v241
  %v247 = vadd.f32 %v237, %v242
  %v248 = vadd.f32 %v238, %v243
  %v249 = vld [vmem:[%s3] sm:$0xff]
  %v250 = vld [vmem:[%s3 + $0x8] sm:$0xff]
  %v251 = vld [vmem:[%s3 + $0x10] sm:$0xff]
  %v252 = vld [vmem:[%s3 + $0x18] sm:$0xff]
  %v253 = vld [vmem:[%s3 + $0x20] sm:$0xff]
  %v254 = vld [vmem:[%s3 + $0x28] sm:$0xff]
  %v255 = vld [vmem:[%s3 + $0x30] sm:$0xff]
  %v256 = vld [vmem:[%s3 + $0x38] sm:$0xff]
  %v257 = vld [vmem:[%s3 + $0x40] sm:$0xff]
  %v258 = vld [vmem:[%s3 + $0x48] sm:$0xff]
  %v259 = vld [vmem:[%s3 + $0x50] sm:$0xff]
  %v260 = vld [vmem:[%s3 + $0x58] sm:$0xff]
  %v261 = vld [vmem:[%s3 + $0x60] sm:$0xff]
  %v262 = vld [vmem:[%s3 + $0x68] sm:$0xff]
  %v263 = vld [vmem:[%s3 + $0x70] sm:$0xff]
  %v264 = vld [vmem:[%s3 + $0x78] sm:$0xff]
  %265 = vmatprep.subr.mxu0 0.0
  %266 = vmatpush1.msra.mxu0 %v249
  %267 = vmatprep.subr.mxu0 0.0
  %268 = vmatpush1.msra.mxu0 %v250
  %269 = vmatprep.subr.mxu0 0.0
  %270 = vmatpush1.msra.mxu0 %v251
  %271 = vmatprep.subr.mxu0 0.0
  %272 = vmatpush1.msra.mxu0 %v252
  %273 = vmatprep.subr.mxu0 0.0
  %274 = vmatpush1.msra.mxu0 %v253
  %275 = vmatprep.subr.mxu0 0.0
  %276 = vmatpush1.msra.mxu0 %v254
  %277 = vmatprep.subr.mxu0 0.0
  %278 = vmatpush1.msra.mxu0 %v255
  %279 = vmatprep.subr.mxu0 0.0
  %280 = vmatpush1.msra.mxu0 %v256
  %281 = vmatprep.subr.mxu0 0.0
  %282 = vmatpush1.msra.mxu0 %v257
  %283 = vmatprep.subr.mxu0 0.0
  %284 = vmatpush1.msra.mxu0 %v258
  %285 = vmatprep.subr.mxu0 0.0
  %286 = vmatpush1.msra.mxu0 %v259
  %287 = vmatprep.subr.mxu0 0.0
  %288 = vmatpush1.msra.mxu0 %v260
  %289 = vmatprep.subr.mxu0 0.0
  %290 = vmatpush1.msra.mxu0 %v261
  %291 = vmatprep.subr.mxu0 0.0
  %292 = vmatpush1.msra.mxu0 %v262
  %293 = vmatprep.subr.mxu0 0.0
  %294 = vmatpush1.msra.mxu0 %v263
  %295 = vmatprep.subr.mxu0 0.0
  %296 = vmatpush1.msra.mxu0 %v264
  %297 = vmatprep.subr.mxu0 0.0
  %298 = vmatpush1.msra.mxu0 0.0
  %299 = vmatprep.subr.mxu0 0.0
  %300 = vmatpush1.msra.mxu0 0.0
  %301 = vmatprep.subr.mxu0 0.0
  %302 = vmatpush1.msra.mxu0 0.0
  %303 = vmatprep.subr.mxu0 0.0
  %304 = vmatpush1.msra.mxu0 0.0
  %305 = vmatprep.subr.mxu0 0.0
  %306 = vmatpush1.msra.mxu0 0.0
  %307 = vmatprep.subr.mxu0 0.0
  %308 = vmatpush1.msra.mxu0 0.0
  %309 = vmatprep.subr.mxu0 0.0
  %310 = vmatpush1.msra.mxu0 0.0
  %311 = vmatprep.subr.mxu0 0.0
  %312 = vmatpush1.msra.mxu0 0.0
  %313 = vmatprep.subr.mxu0 0.0
  %314 = vmatpush1.msra.mxu0 0.0
  %315 = vmatprep.subr.mxu0 0.0
  %316 = vmatpush1.msra.mxu0 0.0
  %317 = vmatprep.subr.mxu0 0.0
  %318 = vmatpush1.msra.mxu0 0.0
  %319 = vmatprep.subr.mxu0 0.0
  %320 = vmatpush1.msra.mxu0 0.0
  %321 = vmatprep.subr.mxu0 0.0
  %322 = vmatpush1.msra.mxu0 0.0
  %323 = vmatprep.subr.mxu0 0.0
  %324 = vmatpush1.msra.mxu0 0.0
  %325 = vmatprep.subr.mxu0 0.0
  %326 = vmatpush1.msra.mxu0 0.0
  %327 = vmatprep.subr.mxu0 0.0
  %328 = vmatpush1.msra.mxu0 0.0
  %329 = vmatprep.mubr.f32.mxu0 0.0
  %330 = vmatmul.mubr.f32.gmra.mrb[0].mxu0 %v244
  %v331 = vpop.f32.mrb[0].mxu0
  %v332 = vadd.f32 0.0, %v331
  %v333 = vpop.f32.mrb[0].mxu0
  %334 = vmatprep.mubr.f32.mxu0 0.0
  %335 = vmatmul.mubr.f32.gmra.mrb[0].mxu0 %v245
  %v336 = vpop.f32.mrb[0].mxu0
  %v337 = vadd.f32 0.0, %v336
  %v338 = vpop.f32.mrb[0].mxu0
  %339 = vmatprep.mubr.f32.mxu0 0.0
  %340 = vmatmul.mubr.f32.gmra.mrb[0].mxu0 %v246
  %v341 = vpop.f32.mrb[0].mxu0
  %v342 = vadd.f32 0.0, %v341
  %v343 = vpop.f32.mrb[0].mxu0
  %344 = vmatprep.mubr.f32.mxu0 0.0
  %345 = vmatmul.mubr.f32.gmra.mrb[0].mxu0 %v247
  %v346 = vpop.f32.mrb[0].mxu0
  %v347 = vadd.f32 0.0, %v346
  %v348 = vpop.f32.mrb[0].mxu0
  %349 = vmatprep.mubr.f32.mxu0 0.0
  %350 = vmatmul.mubr.f32.gmra.mrb[0].mxu0 %v248
  %v351 = vpop.f32.mrb[0].mxu0
  %v352 = vadd.f32 0.0, %v351
  %v353 = vpop.f32.mrb[0].mxu0
  %354 = vdwg.mxu0
  %355 = vst [vmem:[%s4] sm:$0xff] %v332
  %356 = vst [vmem:[%s4 + $0x8] sm:$0xff] %v337
  %357 = vst [vmem:[%s4 + $0x10] sm:$0xff] %v342
  %358 = vst [vmem:[%s4 + $0x18] sm:$0xff] %v347
  %359 = vst [vmem:[%s4 + $0x20] sm:$0xff] %v352
  // Predicated region
  $region18: #{mel_frontend.1} parent=0 // pred_check
    _
  $region19: #{mel_frontend.1} parent=0 // pred_check_branch
    %361 = sbr.rel (0) target = $region21
  $region20: #{mel_frontend.1} parent=0 // pred_region
    _
  $region21: #{mel_frontend.1} parent=0 // pred_fallthru
    _
  // Predicated region
  $region22: #{mel_frontend.1} parent=0 // pred_check
    _
  $region23: #{mel_frontend.1} parent=0 // pred_check_branch
    %363 = sbr.rel (0) target = $region25
  $region24: #{mel_frontend.1} parent=0 // pred_region
    _
  $region25: #{mel_frontend.1} parent=0 // pred_fallthru
    _

</llo_original>
